<compile_context>
chip_gen: v5e
topology: v5e:2x2
jax: 0.10.0
libtpu: 0.0.40
codegen_flags: <defaults>
</compile_context>

<pallas_src>
import jax
import jax.numpy as jnp
from jax.experimental import pallas as pl
from jax.experimental.pallas import tpu as pltpu


def _round_up(x, m):
    return (x + m - 1) // m * m


def _pick_hw_tile(hw, max_tile, want_steps):
    """Pick the tile size for the Hp*Wp (lane) axis.

    Returns (thw, hw_pad) with thw | hw_pad, hw_pad >= hw, and thw a multiple of
    128 whenever hw > 128 (lane-dense loads/stores). want_steps keeps the grid
    long enough for both TensorCores on v7x when the batch axis can't.
    """
    max_tile = max(int(max_tile), 128)
    if hw <= 128:
        return hw, hw
    hw_pad = _round_up(hw, 128)
    n = hw_pad // 128                      # number of 128-lane chunks
    divs = [d for d in range(1, n + 1) if n % d == 0 and 128 * d <= max_tile]
    good = [d for d in divs if (n // d) >= want_steps]
    d = max(good) if good else max(divs)
    return 128 * d, hw_pad


def _proj_kernel(x_ref, w_ref, b_ref, o_ref):
    # x_ref: (1, K, thw) bf16 patches (column-major patches: K on sublanes)
    # w_ref: (E, K) bf16 weight, b_ref: (E, 1) f32 bias, o_ref: (1, E, thw)
    acc = jnp.dot(w_ref[...], x_ref[0], preferred_element_type=jnp.float32)
    o_ref[0] = (acc + b_ref[...]).astype(o_ref.dtype)


def patch_embed_proj(patches_t, w_ek, bias_col, *, thw, out_dtype):
    """patches_t: (B, K, HWp) compute dtype; w_ek: (E, K); bias_col: (E, 1) f32.

    Returns (B, E, HWp) in out_dtype.  Requires HWp % thw == 0 and
    (thw % 128 == 0 or thw == HWp) — guaranteed by the wrapper.
    """
    B, K, HWp = patches_t.shape
    E, _ = w_ek.shape
    assert HWp % thw == 0 and (thw % 128 == 0 or thw == HWp)
    n_hw = HWp // thw
    in_itemsize = patches_t.dtype.itemsize
    out_itemsize = jnp.dtype(out_dtype).itemsize

    # Double-buffered input/output tiles + resident weight/bias + headroom.
    vmem_bytes = int(
        2 * K * thw * in_itemsize            # patch tiles (double-buffered)
        + 2 * E * thw * out_itemsize         # output tiles (double-buffered)
        + 2 * E * K * w_ek.dtype.itemsize    # weight
        + 2 * E * 4                          # bias
        + (2 << 20)                          # headroom
    )

    cost = pl.CostEstimate(
        flops=2 * B * HWp * K * E,
        transcendentals=0,
        bytes_accessed=(
            B * K * HWp * in_itemsize
            + E * K * w_ek.dtype.itemsize
            + E * 4
            + B * E * HWp * out_itemsize
        ),
    )

    return pl.pallas_call(
        _proj_kernel,
        out_shape=jax.ShapeDtypeStruct((B, E, HWp), out_dtype),
        grid_spec=pltpu.PrefetchScalarGridSpec(
            num_scalar_prefetch=0,
            grid=(B, n_hw),
            in_specs=[
                pl.BlockSpec((1, K, thw), lambda b, t: (b, 0, t)),  # patches tile
                pl.BlockSpec((E, K), lambda b, t: (0, 0)),          # weight (resident)
                pl.BlockSpec((E, 1), lambda b, t: (0, 0)),          # bias (resident)
            ],
            out_specs=pl.BlockSpec((1, E, thw), lambda b, t: (b, 0, t)),
        ),
        compiler_params=pltpu.CompilerParams(
            dimension_semantics=("parallel", "parallel"),
            vmem_limit_bytes=vmem_bytes,
        ),
        cost_estimate=cost,
    )(patches_t, w_ek, bias_col)


class PatchEmbedPallas:
    def __init__(self, patch_size=4, in_chans=3, embed_dim=96, key=None,
                 compute_dtype=jnp.bfloat16, out_dtype=None):
        if isinstance(patch_size, int):
            patch_size = (patch_size, patch_size)
        self.patch_size = patch_size
        self.in_chans = in_chans
        self.embed_dim = embed_dim
        self.compute_dtype = compute_dtype
        # bf16 output by default (review): matmul inputs are already bf16 and the
        # downstream transformer consumes bf16; pass out_dtype=jnp.float32 to match
        # the PyTorch module's dtype exactly.
        self.out_dtype = compute_dtype if out_dtype is None else out_dtype

        ph, pw = patch_size
        K = in_chans * ph * pw
        self.K = K

        k = key if key is not None else jax.random.PRNGKey(0)
        kw, kb = jax.random.split(k)
        bound = 1.0 / float(K) ** 0.5
        # Conv2d weight: (embed_dim, in_chans, ph, pw), deterministic init.
        conv_w = jax.random.uniform(
            kw, (embed_dim, in_chans, ph, pw), jnp.float32, -bound, bound
        )
        conv_b = jax.random.uniform(kb, (embed_dim,), jnp.float32, -bound, bound)

        # Matmul form: (E, K), flatten order (C, ph, pw) matching the patch layout.
        self.w_ek = conv_w.reshape(embed_dim, K)        # f32 master (reference)
        self.bias = conv_b                              # f32 master
        self.w_ek_c = self.w_ek.astype(compute_dtype)   # kernel weight (bf16)
        self.bias_col = conv_b.reshape(embed_dim, 1)    # kernel bias (f32)

    def __call__(self, x, max_hw_tile=8192):
        # x: (B, C, H, W) NCHW float32
        B, C, H, W = x.shape
        assert C == self.in_chans
        ph, pw = self.patch_size
        pad_h = (-H) % ph
        pad_w = (-W) % pw
        if pad_h or pad_w:
            x = jnp.pad(x, ((0, 0), (0, 0), (0, pad_h), (0, pad_w)))
        Hp = (H + pad_h) // ph
        Wp = (W + pad_w) // pw
        HW = Hp * Wp
        E, K = self.embed_dim, self.K

        # Build patches in (B, K, HW) layout (K = c*ph*pw + i*pw + j, HW = hp*Wp + wp)
        # so the kernel can emit (B, E, HW) directly in NCHW order.
        # TODO(synk): fuse this extraction/cast into the kernel (strided BlockSpec on
        # the padded NCHW x) to drop this remaining wrapper HBM pass.
        p = x.astype(self.compute_dtype)
        p = p.reshape(B, C, Hp, ph, Wp, pw).transpose(0, 1, 3, 5, 2, 4)
        p = p.reshape(B, K, HW)

        in_itemsize = jnp.dtype(self.compute_dtype).itemsize
        out_itemsize = jnp.dtype(self.out_dtype).itemsize
        # Cap the tile so the double-buffered VMEM footprint stays <= ~12 MiB
        # (comfortable on every generation, incl. v5e's small scoped default).
        bytes_per_col = 2 * K * in_itemsize + 2 * E * out_itemsize
        vmem_cap = max(128, ((12 << 20) // bytes_per_col) // 128 * 128)
        want_steps = 1 if B >= 2 else 2   # keep >=2 grid steps for v7x's 2 TCs
        thw, hw_pad = _pick_hw_tile(HW, min(max_hw_tile, vmem_cap), want_steps)
        if hw_pad > HW:
            # <128 columns of zero pad, only when HW isn't a 128 multiple.
            # TODO(synk): replace with a masked ragged last tile to avoid the pad.
            p = jnp.pad(p, ((0, 0), (0, 0), (0, hw_pad - HW)))

        out = patch_embed_proj(p, self.w_ek_c, self.bias_col,
                               thw=thw, out_dtype=self.out_dtype)  # (B, E, hw_pad)
        if hw_pad > HW:
            out = out[..., :HW]
        # Already NCHW-ordered: just split HW back into (Hp, Wp).
        return out.reshape(B, E, Hp, Wp)


def _reference(x, module):
    # Pure-JAX reference with the same bf16-input / f32-accumulate math.
    B, C, H, W = x.shape
    ph, pw = module.patch_size
    pad_h = (-H) % ph
    pad_w = (-W) % pw
    if pad_h or pad_w:
        x = jnp.pad(x, ((0, 0), (0, 0), (0, pad_h), (0, pad_w)))
    Hp, Wp = (H + pad_h) // ph, (W + pad_w) // pw
    p = x.astype(module.compute_dtype).reshape(B, C, Hp, ph, Wp, pw)
    p = p.transpose(0, 1, 3, 5, 2, 4).reshape(B, module.K, Hp * Wp)
    w = module.w_ek.astype(module.compute_dtype)
    o = jnp.einsum("ek,bkm->bem", w, p, preferred_element_type=jnp.float32)
    o = o + module.bias.reshape(1, module.embed_dim, 1)
    return o.astype(module.out_dtype).reshape(B, module.embed_dim, Hp, Wp)


if __name__ == "__main__":
    key = jax.random.PRNGKey(0)
    kx, kp = jax.random.split(key)

    # Small shapes: batch=2, in_chans=4, spatial=16x16, patch=4, embed_dim=32
    B, C, H, W = 2, 4, 16, 16
    x = jax.random.normal(kx, (B, C, H, W), jnp.float32)

    module = PatchEmbedPallas(patch_size=4, in_chans=C, embed_dim=32, key=kp)
    out = jax.block_until_ready(module(x))

    ref = _reference(x, module)
    assert out.shape == (B, 32, H // 4, W // 4), out.shape
    err = float(jnp.max(jnp.abs(out.astype(jnp.float32) - ref.astype(jnp.float32))))
    assert err < 2e-2, err

    print("KERNEL_OK")
</pallas_src>

<mosaic_0001>
module attributes {stable_mosaic.version = 11 : i64} {
  func.func @_proj_kernel(%arg0: i32, %arg1: i32, %arg2: memref<1x64x16xbf16, #tpu.memory_space<vmem>>, %arg3: memref<32x64xbf16, #tpu.memory_space<vmem>>, %arg4: memref<32x1xf32, #tpu.memory_space<vmem>>, %arg5: memref<1x32x16xbf16, #tpu.memory_space<vmem>>) attributes {dimension_semantics = [#tpu.dimension_semantics<parallel>, #tpu.dimension_semantics<parallel>], iteration_bounds = array<i64: 2, 1>, scalar_prefetch = 0 : i64, scratch_operands = 0 : i64, tpu.core_type = #tpu.core_type<tc>, window_params = [{transform_indices = @transform_0, window_bounds = array<i64: 1, 64, 16>}, {pipeline_mode = #tpu.pipeline_mode<synchronous>, transform_indices = @transform_1, window_bounds = array<i64: 32, 64>}, {pipeline_mode = #tpu.pipeline_mode<synchronous>, transform_indices = @transform_2, window_bounds = array<i64: 32, 1>}, {transform_indices = @transform_3, window_bounds = array<i64: 1, 32, 16>}]} {
    %c0 = arith.constant 0 : index
    %c0_0 = arith.constant 0 : index
    %0 = vector.load %arg3[%c0, %c0_0] : memref<32x64xbf16, #tpu.memory_space<vmem>>, vector<32x64xbf16>
    %c0_1 = arith.constant 0 : index
    %c0_2 = arith.constant 0 : index
    %c0_3 = arith.constant 0 : index
    %1 = vector.load %arg2[%c0_1, %c0_2, %c0_3] : memref<1x64x16xbf16, #tpu.memory_space<vmem>>, vector<1x64x16xbf16>
    %2 = vector.shape_cast %1 : vector<1x64x16xbf16> to vector<64x16xbf16>
    %cst = arith.constant dense<0.000000e+00> : vector<32x16xf32>
    %3 = tpu.matmul %0, %2, %cst {dimension_numbers = #tpu.dot_dimension_numbers<[1], [0], [0], [1], [0, 0, 1, 1], [], []>} : vector<32x64xbf16>, vector<64x16xbf16>, vector<32x16xf32> -> vector<32x16xf32>
    %c0_4 = arith.constant 0 : index
    %c0_5 = arith.constant 0 : index
    %4 = vector.load %arg4[%c0_4, %c0_5] : memref<32x1xf32, #tpu.memory_space<vmem>>, vector<32x1xf32>
    %5 = vector.broadcast %4 : vector<32x1xf32> to vector<32x16xf32>
    %6 = arith.addf %3, %5 : vector<32x16xf32>
    %7 = arith.truncf %6 : vector<32x16xf32> to vector<32x16xbf16>
    %c0_6 = arith.constant 0 : index
    %c0_7 = arith.constant 0 : index
    %c0_8 = arith.constant 0 : index
    %8 = vector.load %arg5[%c0_6, %c0_7, %c0_8] : memref<1x32x16xbf16, #tpu.memory_space<vmem>>, vector<1x32x16xbf16>
    %9 = vector.shape_cast %8 : vector<1x32x16xbf16> to vector<32x16xbf16>
    %10 = vector.shape_cast %7 : vector<32x16xbf16> to vector<1x32x16xbf16>
    tpu.vector_store %arg5[%c0_6, %c0_7, %c0_8], %10 {strides = array<i32>} : memref<1x32x16xbf16, #tpu.memory_space<vmem>>, vector<1x32x16xbf16>,
    return
  }
  func.func @transform_0(%arg0: i32, %arg1: i32) -> (i32, i32, i32) {
    %c0_i32 = arith.constant 0 : i32
    %c0_i32_0 = arith.constant 0 : i32
    return %arg0, %c0_i32, %arg1 : i32, i32, i32
  }
  func.func @transform_1(%arg0: i32, %arg1: i32) -> (i32, i32) {
    %c0_i32 = arith.constant 0 : i32
    %c0_i32_0 = arith.constant 0 : i32
    %c0_i32_1 = arith.constant 0 : i32
    return %c0_i32, %c0_i32_0 : i32, i32
  }
  func.func @transform_2(%arg0: i32, %arg1: i32) -> (i32, i32) {
    %c0_i32 = arith.constant 0 : i32
    %c0_i32_0 = arith.constant 0 : i32
    %c0_i32_1 = arith.constant 0 : i32
    return %c0_i32, %c0_i32_0 : i32, i32
  }
  func.func @transform_3(%arg0: i32, %arg1: i32) -> (i32, i32, i32) {
    %c0_i32 = arith.constant 0 : i32
    %c0_i32_0 = arith.constant 0 : i32
    return %arg0, %c0_i32, %arg1 : i32, i32, i32
  }
}

</mosaic_0001>

<llo_original>
// kernel: tpu_custom_call.1
$region0: #{tpu_custom_call.1}
  #allocation0 [shape = 'u32[]', space=smem, size = 0x4, offset = 0x4, fixed_abs, tag = 'smem constant byte address 0x4 - core index']
  #allocation1 [shape = 'u32[72,128]{1,0:T(1,128)}', space=vmem, size = 0x9000, scoped, tag = 'internal scratch']
  %s0 = inlined_call_operand.vmem [shape: bf16[2,64,16], index: 0, kind: input, shape index: {}]
  %s1 = inlined_call_operand.vmem [shape: bf16[32,64], index: 1, kind: input, shape index: {}]
  %s2 = inlined_call_operand.vmem [shape: f32[32,1], index: 2, kind: input, shape index: {}]
  %s3 = inlined_call_operand.vmem [shape: bf16[2,32,16], index: 3, kind: output, shape index: {}]
  %s4 = sld [smem:[#allocation0]]
  $region45: #{tpu_custom_call.1} parent=0
    _
  %s6 = ssub.s32 1, %s4
  %s7 = scalar_select 0, %s6, %s4
  loop: start=0, step=1, limit=4
  $region2: #{tpu_custom_call.1} parent=0 // loop_pre_header
    _
  $region3: #{tpu_custom_call.1} parent=0 // loop_header
    %s9 = sphi 0, %s13
    %p10 = scmp.ge.s32.totalorder %s9, 4
    %s16 = sphi 0, %s28
    %s17 = sphi 0, %s24
    %s18 = sphi 0, %s16
    %s19 = sphi 0, %s17
    %s20 = sphi 0, %s18
    %s21 = sphi 0, %s19
    %s33 = sphi 0, %s35
    %s36 = sphi 0, %s33
    %s37 = sphi 0, %s36
    %s53 = sphi 0, %s37
    %s57 = sphi 0, %s57
    %s59 = sphi 0, %s57
    %s60 = sphi 0, %s59
    %s74 = sphi 0, %s60
    %s78 = sphi 0, %s78
    %s80 = sphi 0, %s78
    %s81 = sphi 0, %s80
    %s95 = sphi 0, %s81
    %s103 = sphi 0, %s105
    %s106 = sphi 0, %s103
    %s107 = sphi 0, %s106
    %s123 = sphi 0, %s107
  $region4: #{tpu_custom_call.1} parent=0 // loop_header_branch
    %12 = sbr.rel (%p10) target = $region8
  $region5: #{tpu_custom_call.1} parent=0 // loop_body
    %s14 = ssub.s32 %s9, 1
    %s15 = ssub.s32 %s9, 2
    %s22 = sadd.s32 1, %s17
    %p23 = scmp.ge.s32.totalorder %s22, 1
    %s24 = scalar_select %p23, 0, %s22
    %s25 = sadd.s32 1, %s16
    %s26 = scalar_select %p23, %s25, %s16
    %p27 = scmp.ge.s32.totalorder %s26, 2
    %s28 = scalar_select %p27, 0, %s26
    %s29 = ssub.s32 %s16, %s28
    %s30 = ssub.s32 %s17, %s24
    %s31 = sor.u32 %s29, %s30
    %p32 = scmp.eq.s32.totalorder %s31, 0
    %s34 = sadd.s32 %s33, 1
    %s35 = scalar_select %p32, %s33, %s34
    %p38 = pneg %p32
    %p39 = scmp.eq.s32.totalorder %s9, 1
    %p40 = por %p38, %p39
    %p41 = scmp.ne.s32.totalorder %s33, %s36
    %p42 = scmp.eq.s32.totalorder %s9, 0
    %p43 = por %p41, %p42
    %p44 = scmp.ne.s32.totalorder %s33, %s36
    %p45 = scmp.eq.s32.totalorder %s14, 1
    %p46 = por %p44, %p45
    %p47 = scmp.ne.s32.totalorder %s36, %s37
    %p48 = scmp.eq.s32.totalorder %s14, 0
    %p49 = por %p47, %p48
    %p50 = scmp.ne.s32.totalorder %s36, %s37
    %p51 = scmp.eq.s32.totalorder %s15, 1
    %p52 = por %p50, %p51
    %p54 = scmp.ne.s32.totalorder %s37, %s53
    %p55 = scmp.eq.s32.totalorder %s15, 0
    %p56 = por %p54, %p55
    %s58 = sadd.s32 %s57, 1
    %p61 = scmp.eq.s32.totalorder %s9, 1
    %p62 = scmp.ne.s32.totalorder %s57, %s59
    %p63 = scmp.eq.s32.totalorder %s9, 0
    %p64 = por %p62, %p63
    %p65 = scmp.ne.s32.totalorder %s57, %s59
    %p66 = scmp.eq.s32.totalorder %s14, 1
    %p67 = por %p65, %p66
    %p68 = scmp.ne.s32.totalorder %s59, %s60
    %p69 = scmp.eq.s32.totalorder %s14, 0
    %p70 = por %p68, %p69
    %p71 = scmp.ne.s32.totalorder %s59, %s60
    %p72 = scmp.eq.s32.totalorder %s15, 1
    %p73 = por %p71, %p72
    %p75 = scmp.ne.s32.totalorder %s60, %s74
    %p76 = scmp.eq.s32.totalorder %s15, 0
    %p77 = por %p75, %p76
    %s79 = sadd.s32 %s78, 1
    %p82 = scmp.eq.s32.totalorder %s9, 1
    %p83 = scmp.ne.s32.totalorder %s78, %s80
    %p84 = scmp.eq.s32.totalorder %s9, 0
    %p85 = por %p83, %p84
    %p86 = scmp.ne.s32.totalorder %s78, %s80
    %p87 = scmp.eq.s32.totalorder %s14, 1
    %p88 = por %p86, %p87
    %p89 = scmp.ne.s32.totalorder %s80, %s81
    %p90 = scmp.eq.s32.totalorder %s14, 0
    %p91 = por %p89, %p90
    %p92 = scmp.ne.s32.totalorder %s80, %s81
    %p93 = scmp.eq.s32.totalorder %s15, 1
    %p94 = por %p92, %p93
    %p96 = scmp.ne.s32.totalorder %s81, %s95
    %p97 = scmp.eq.s32.totalorder %s15, 0
    %p98 = por %p96, %p97
    %s99 = ssub.s32 %s16, %s28
    %s100 = ssub.s32 %s17, %s24
    %s101 = sor.u32 %s99, %s100
    %p102 = scmp.eq.s32.totalorder %s101, 0
    %s104 = sadd.s32 %s103, 1
    %s105 = scalar_select %p102, %s103, %s104
    %p108 = pneg %p102
    %p109 = scmp.eq.s32.totalorder %s9, 1
    %p110 = por %p108, %p109
    %p111 = scmp.ne.s32.totalorder %s103, %s106
    %p112 = scmp.eq.s32.totalorder %s9, 0
    %p113 = por %p111, %p112
    %p114 = scmp.ne.s32.totalorder %s103, %s106
    %p115 = scmp.eq.s32.totalorder %s14, 1
    %p116 = por %p114, %p115
    %p117 = scmp.ne.s32.totalorder %s106, %s107
    %p118 = scmp.eq.s32.totalorder %s14, 0
    %p119 = por %p117, %p118
    %p120 = scmp.ne.s32.totalorder %s106, %s107
    %p121 = scmp.eq.s32.totalorder %s15, 1
    %p122 = por %p120, %p121
    %p124 = scmp.ne.s32.totalorder %s107, %s123
    %p125 = scmp.eq.s32.totalorder %s15, 0
    %p126 = por %p124, %p125
    %p127 = scmp.le.s32.totalorder 1, %s9
    %p128 = scmp.lt.s32.totalorder %s9, 3
    %p129 = pnand %p127, %p128
    %p130 = pneg %p129
    // Predicated region
    $region9: #{tpu_custom_call.1} parent=5 // pred_check
      _
    $region10: #{tpu_custom_call.1} parent=5 // pred_check_branch
      %132 = sbr.rel (%p129) target = $region12
    $region11: #{tpu_custom_call.1} parent=5 // pred_region
      %s133 = ssub.s32 %s9, 1
      // Predicated region
      $region13: #{tpu_custom_call.1} parent=11 // pred_check
        %p134 = pneg %p70
      $region14: #{tpu_custom_call.1} parent=11 // pred_check_branch
        %136 = sbr.rel (%p134) target = $region16
      $region15: #{tpu_custom_call.1} parent=11 // pred_region
        _
      $region16: #{tpu_custom_call.1} parent=11 // pred_fallthru
        _
      // Predicated region
      $region17: #{tpu_custom_call.1} parent=11 // pred_check
        %p137 = pneg %p91
      $region18: #{tpu_custom_call.1} parent=11 // pred_check_branch
        %139 = sbr.rel (%p137) target = $region20
      $region19: #{tpu_custom_call.1} parent=11 // pred_region
        _
      $region20: #{tpu_custom_call.1} parent=11 // pred_fallthru
        _
    $region12: #{tpu_custom_call.1} parent=5 // pred_fallthru
      _
    %p140 = scmp.lt.s32.totalorder %s9, 2
    // Predicated region
    $region21: #{tpu_custom_call.1} parent=5 // pred_check
      %p141 = pneg %p140
    $region22: #{tpu_custom_call.1} parent=5 // pred_check_branch
      %143 = sbr.rel (%p141) target = $region24
    $region23: #{tpu_custom_call.1} parent=5 // pred_region
      // Predicated region
      $region25: #{tpu_custom_call.1} parent=23 // pred_check
        %p144 = pneg %p43
      $region26: #{tpu_custom_call.1} parent=23 // pred_check_branch
        %146 = sbr.rel (%p144) target = $region28
      $region27: #{tpu_custom_call.1} parent=23 // pred_region
        %p147 = scmp.lt.s32.totalorder %s16, 1
        %s148 = scalar_select %p147, %s16, 1
        %p149 = scmp.lt.s32.totalorder %s17, 0
        %s150 = scalar_select %p149, %s17, 0
        %s151 = smul.addr %s148, 8
        %s152 = sadd.s32 %s150, %s151
        %s153 = smul.addr %s152, 4
        %s154 = scalar_lea.vmem %s0, %s153
      $region28: #{tpu_custom_call.1} parent=23 // pred_fallthru
        _
    $region24: #{tpu_custom_call.1} parent=5 // pred_fallthru
      _
    %p155 = scmp.le.s32.totalorder 1, %s9
    %p156 = scmp.lt.s32.totalorder %s9, 3
    %p157 = pnand %p155, %p156
    %p158 = pneg %p157
    // Predicated region
    $region29: #{tpu_custom_call.1} parent=5 // pred_check
      _
    $region30: #{tpu_custom_call.1} parent=5 // pred_check_branch
      %160 = sbr.rel (%p157) target = $region32
    $region31: #{tpu_custom_call.1} parent=5 // pred_region
      %s161 = ssub.s32 %s9, 1
      %p162 = scmp.lt.s32.totalorder %s18, 1
      %s163 = scalar_select %p162, %s18, 1
      %p164 = scmp.lt.s32.totalorder %s19, 0
      %s165 = scalar_select %p164, %s19, 0
      %s166 = smul.addr %s163, 8
      %s167 = sadd.s32 %s165, %s166
      %s168 = smul.addr %s167, 4
      %s169 = scalar_lea.vmem %s0, %s168
      %p170 = pneg %p49
      %p171 = pneg %p46
      %p172 = pneg %p70
      %p173 = pneg %p67
      %p174 = pneg %p91
      %p175 = pneg %p88
      %p176 = pneg %p119
      %p177 = pneg %p116
      %p178 = scmp.lt.s32.totalorder %s18, 1
      %s179 = scalar_select %p178, %s18, 1
      %p180 = scmp.lt.s32.totalorder %s19, 0
      %s181 = scalar_select %p180, %s19, 0
      %s182 = smul.addr %s179, 4
      %s183 = sadd.s32 %s181, %s182
      %s184 = smul.addr %s183, 4
      %s185 = scalar_lea.vmem %s3, %s184
      %p186 = scmp.lt.s32.totalorder %s18, 1
      %s187 = scalar_select %p186, %s18, 1
      %p188 = scmp.lt.s32.totalorder %s19, 0
      %s189 = scalar_select %p188, %s19, 0
      %s190 = smul.addr %s187, 8
      %s191 = sadd.s32 %s189, %s190
      %s192 = smul.addr %s191, 4
      %s193 = scalar_lea.vmem %s0, %s192
      %p194 = scmp.lt.s32.totalorder %s18, 1
      %s195 = scalar_select %p194, %s18, 1
      %p196 = scmp.lt.s32.totalorder %s19, 0
      %s197 = scalar_select %p196, %s19, 0
      %s198 = smul.addr %s195, 4
      %s199 = sadd.s32 %s197, %s198
      %s200 = smul.addr %s199, 4
      %s201 = scalar_lea.vmem %s3, %s200
      %v203 = vld [vmem:[%s1] sm:$0xf]
      %v204 = vld [vmem:[%s1 + $0x4] sm:$0xf]
      %v205 = vld [vmem:[%s1 + $0x8] sm:$0xf]
      %v206 = vld [vmem:[%s1 + $0xc] sm:$0xf]
      %v207 = vld [vmem:[%s193] sm:$0xf]
      %v208 = vld [vmem:[%s193 + $0x4] sm:$0xf]
      %v209 = vld [vmem:[%s193 + $0x8] sm:$0xf]
      %v210 = vld [vmem:[%s193 + $0xc] sm:$0xf]
      %v211 = vld [vmem:[%s193 + $0x10] sm:$0xf]
      %v212 = vld [vmem:[%s193 + $0x14] sm:$0xf]
      %v213 = vld [vmem:[%s193 + $0x18] sm:$0xf]
      %v214 = vld [vmem:[%s193 + $0x1c] sm:$0xf]
      %v215 = vld [vmem:[%s2] sm:$0xff]
      %v216 = vld [vmem:[%s2 + $0x8] sm:$0xff]
      %v217 = vld [vmem:[%s2 + $0x10] sm:$0xff]
      %v218 = vld [vmem:[%s2 + $0x18] sm:$0xff]
      %220 = vset.pattern.permute.xlu0 0
      %221 = vperm.xlu0 %220, %v215
      %v222 = vpop.permute.xlu0 %221
      %225 = vset.pattern.permute.xlu0 0
      %226 = vperm.xlu0 %225, %v216
      %v227 = vpop.permute.xlu0 %226
      %230 = vset.pattern.permute.xlu0 0
      %231 = vperm.xlu0 %230, %v217
      %v232 = vpop.permute.xlu0 %231
      %235 = vset.pattern.permute.xlu0 0
      %236 = vperm.xlu0 %235, %v218
      %v237 = vpop.permute.xlu0 %236
      %v243 = vunpack.c.l.b16 %v203
      %v244 = vunpack.c.l.b16 %v204
      %v245 = vunpack.c.l.b16 %v205
      %v246 = vunpack.c.l.b16 %v206
      %v247 = vpack.c.b16 %v244, %v243
      %v248 = vpack.c.b16 %v246, %v245
      %v257 = vunpack.c.l.b16 %v207
      %v258 = vunpack.c.l.b16 %v208
      %v259 = vunpack.c.l.b16 %v209
      %v260 = vunpack.c.l.b16 %v210
      %v261 = vunpack.c.l.b16 %v211
      %v262 = vunpack.c.l.b16 %v212
      %v263 = vunpack.c.l.b16 %v213
      %v264 = vunpack.c.l.b16 %v214
      %v265 = vpack.c.b16 %v258, %v257
      %v266 = vpack.c.b16 %v260, %v259
      %v267 = vpack.c.b16 %v262, %v261
      %v268 = vpack.c.b16 %v264, %v263
      %vm273 = vcmask 523264
      %v275 = vsel %vm273, %v247, 0
      %v278 = vsel %vm273, %v248, 0
      %280 = vmatpush.bf16.msra.mxu0 0
      %281 = vmatpush.bf16.msra.mxu0 0
      %282 = vmatpush.bf16.msra.mxu0 0
      %283 = vmatpush.bf16.msra.mxu0 0
      %284 = vmatpush.bf16.msra.mxu0 %v268
      %285 = vmatpush.bf16.msra.mxu0 %v267
      %286 = vmatpush.bf16.msra.mxu0 %v266
      %287 = vmatpush.bf16.msra.mxu0 %v265
      %288 = vmatmul.bf16.gmra.mxu0 %v275
      %v289 = vpop.f32.mrf.mxu0
      %v290 = vadd.f32 %v222, %v289
      %v291 = vpop.f32.mrf.mxu0
      %v292 = vadd.f32 %v227, %v291
      %293 = vmatmul.bf16.gmra.mxu0 %v278
      %v294 = vpop.f32.mrf.mxu0
      %v295 = vadd.f32 %v232, %v294
      %v296 = vpop.f32.mrf.mxu0
      %v297 = vadd.f32 %v237, %v296
      %298 = vdwg.mxu0
      %v299 = vpack.c.bf16 %v290, %v290
      %v300 = vpack.c.bf16 %v292, %v292
      %v301 = vpack.c.bf16 %v295, %v295
      %v302 = vpack.c.bf16 %v297, %v297
      %vm303 = vcmask 125952
      %304 = vst.msk [vmem:[%s201] sm:$0xf] %vm303, %v299
      %305 = vst.msk [vmem:[%s201 + $0x4] sm:$0xf] %vm303, %v300
      %306 = vst.msk [vmem:[%s201 + $0x8] sm:$0xf] %vm303, %v301
      %307 = vst.msk [vmem:[%s201 + $0xc] sm:$0xf] %vm303, %v302
      %p308 = scmp.lt.s32.totalorder %s18, 1
      %s309 = scalar_select %p308, %s18, 1
      %p310 = scmp.lt.s32.totalorder %s19, 0
      %s311 = scalar_select %p310, %s19, 0
      %s312 = smul.addr %s309, 4
      %s313 = sadd.s32 %s311, %s312
      %s314 = smul.addr %s313, 4
      %s315 = scalar_lea.vmem %s3, %s314
      // Predicated region
      $region33: #{tpu_custom_call.1} parent=31 // pred_check
        %p316 = pneg %p116
      $region34: #{tpu_custom_call.1} parent=31 // pred_check_branch
        %318 = sbr.rel (%p316) target = $region36
      $region35: #{tpu_custom_call.1} parent=31 // pred_region
        _
      $region36: #{tpu_custom_call.1} parent=31 // pred_fallthru
        _
    $region32: #{tpu_custom_call.1} parent=5 // pred_fallthru
      _
    %p319 = scmp.le.s32.totalorder 2, %s9
    // Predicated region
    $region37: #{tpu_custom_call.1} parent=5 // pred_check
      %p320 = pneg %p319
    $region38: #{tpu_custom_call.1} parent=5 // pred_check_branch
      %322 = sbr.rel (%p320) target = $region40
    $region39: #{tpu_custom_call.1} parent=5 // pred_region
      %s323 = ssub.s32 %s9, 2
      // Predicated region
      $region41: #{tpu_custom_call.1} parent=39 // pred_check
        %p324 = pneg %p122
      $region42: #{tpu_custom_call.1} parent=39 // pred_check_branch
        %326 = sbr.rel (%p324) target = $region44
      $region43: #{tpu_custom_call.1} parent=39 // pred_region
        %p327 = scmp.lt.s32.totalorder %s20, 1
        %s328 = scalar_select %p327, %s20, 1
        %p329 = scmp.lt.s32.totalorder %s21, 0
        %s330 = scalar_select %p329, %s21, 0
        %s331 = smul.addr %s328, 4
        %s332 = sadd.s32 %s330, %s331
        %s333 = smul.addr %s332, 4
        %s334 = scalar_lea.vmem %s3, %s333
      $region44: #{tpu_custom_call.1} parent=39 // pred_fallthru
        _
    $region40: #{tpu_custom_call.1} parent=5 // pred_fallthru
      _
  $region6: #{tpu_custom_call.1} parent=0 // loop_footer
    %s13 = sadd.s32 1, %s9
  $region7: #{tpu_custom_call.1} parent=0 // loop_footer_branch
    %8 = sbr.rel target = $region3
  $region8: #{tpu_custom_call.1} parent=0 // loop_exit
    _

</llo_original>
